<compile_context>
chip_gen: v7x
topology: tpu7x:2x2x1
jax: 0.10.0
libtpu: 0.0.40
codegen_flags: <defaults>
</compile_context>

<pallas_src>
import jax
import jax.numpy as jnp
from jax import lax
from jax.experimental import pallas as pl
from jax.experimental.pallas import tpu as pltpu

# Logical model shapes (GluonTS-style forecasting setup).
CONTEXT = 32          # context_length (input window)
HIDDEN = 64
HIDDEN_PAD = 128      # hidden dim zero-padded to a full lane width
PRED = 16             # prediction_length (forecast horizon)

# Batch tiling: 256 fills the v6e/v7x 256-wide MXU M dimension.
TILE_B = 256
BATCH = 512           # demo batch -> 2 tiles, exercises the parallel-partials path


def train_loss_kernel(past_ref, future_ref, w1_ref, b1_ref, w2_ref, b2_ref,
                      partial_ref):
    # hidden = ReLU(past @ W1 + b1): bf16 MXU operands (cast in-kernel),
    # f32 accumulate, f32 bias/ReLU on the VPU (v5e-safe).
    h = jnp.dot(past_ref[...].astype(jnp.bfloat16), w1_ref[...],
                preferred_element_type=jnp.float32)
    h = jnp.maximum(h + b1_ref[...], 0.0)

    # prediction = hidden @ W2 + b2: bf16 MXU operands, f32 accumulate.
    pred = jnp.dot(h.astype(jnp.bfloat16), w2_ref[...],
                   preferred_element_type=jnp.float32)
    pred = pred + b2_ref[...]

    # Per-tile squared-error partial sum.  Store it into element (0,0) of a
    # lane-dense (1, 8, 128) output block (rest zeros) so the out-spec stays
    # (8,128)-aligned for any number of batch tiles; the cheap cross-tile sum
    # and the 1/N scaling happen outside the kernel.
    err = pred - future_ref[...]
    sq = jnp.sum(err * err)
    sub = lax.broadcasted_iota(jnp.int32, (1, 8, 128), 1)
    lane = lax.broadcasted_iota(jnp.int32, (1, 8, 128), 2)
    partial_ref[...] = jnp.where((sub == 0) & (lane == 0), sq, 0.0)


def init_params(key):
    """Unpadded f32 parameters (the 'original module' view)."""
    k1, k2, k3, k4 = jax.random.split(key, 4)
    w1 = jax.random.normal(k1, (CONTEXT, HIDDEN), jnp.float32) * 0.1
    b1 = jax.random.normal(k2, (1, HIDDEN), jnp.float32) * 0.01
    w2 = jax.random.normal(k3, (HIDDEN, PRED), jnp.float32) * 0.1
    b2 = jax.random.normal(k4, (1, PRED), jnp.float32) * 0.01
    return w1, b1, w2, b2


def prepare_params(params):
    """One-time: zero-pad ONLY the hidden dim to 128 lanes, cast weights to bf16.

    Zero hidden columns of W1 / zero bias entries give ReLU(0)=0 which hit zero
    rows of W2 -> mathematically inert.  CONTEXT and PRED stay unpadded.
    """
    w1, b1, w2, b2 = params
    w1p = (jnp.zeros((CONTEXT, HIDDEN_PAD), jnp.float32)
           .at[:, :HIDDEN].set(w1).astype(jnp.bfloat16))
    b1p = jnp.zeros((1, HIDDEN_PAD), jnp.float32).at[:, :HIDDEN].set(b1)
    w2p = (jnp.zeros((HIDDEN_PAD, PRED), jnp.float32)
           .at[:HIDDEN, :].set(w2).astype(jnp.bfloat16))
    b2p = b2.astype(jnp.float32)
    return w1p, b1p, w2p, b2p


@jax.jit
def example_train_network_forward(past_target, future_target, padded_params):
    """Returns the scalar MSE training loss (POINT forecast path)."""
    w1p, b1p, w2p, b2p = padded_params
    # Guard against raw (unpadded) params being passed by mistake.
    assert w1p.shape == (CONTEXT, HIDDEN_PAD) and w1p.dtype == jnp.bfloat16
    assert b1p.shape == (1, HIDDEN_PAD)
    assert w2p.shape == (HIDDEN_PAD, PRED) and w2p.dtype == jnp.bfloat16
    assert b2p.shape == (1, PRED)

    b, c = past_target.shape
    bf, p = future_target.shape
    assert b == bf and c == CONTEXT and p == PRED

    tile_b = min(TILE_B, b)
    assert b % tile_b == 0, "batch must be a multiple of the batch tile"
    num_tiles = b // tile_b
    inv_n = 1.0 / float(b * p)   # precomputed -> no divide in the kernel

    partials = pl.pallas_call(
        train_loss_kernel,
        out_shape=jax.ShapeDtypeStruct((num_tiles, 8, 128), jnp.float32),
        grid_spec=pltpu.PrefetchScalarGridSpec(
            num_scalar_prefetch=0,
            grid=(num_tiles,),
            in_specs=[
                # streamed per batch tile, unpadded (last dim == full array dim)
                pl.BlockSpec((tile_b, CONTEXT), lambda i: (i, 0)),
                pl.BlockSpec((tile_b, PRED), lambda i: (i, 0)),
                # weights/biases: constant index_map -> resident in VMEM,
                # DMA'd once (double-buffer overhead is negligible here).
                pl.BlockSpec((CONTEXT, HIDDEN_PAD), lambda i: (0, 0)),
                pl.BlockSpec((1, HIDDEN_PAD), lambda i: (0, 0)),
                pl.BlockSpec((HIDDEN_PAD, PRED), lambda i: (0, 0)),
                pl.BlockSpec((1, PRED), lambda i: (0, 0)),
            ],
            out_specs=pl.BlockSpec((1, 8, 128), lambda i: (i, 0, 0)),
        ),
        compiler_params=pltpu.CompilerParams(
            # Independent per-tile partials -> batch tiles shard across
            # TensorCores on v7x megacore.
            dimension_semantics=("parallel",)),
    )(past_target, future_target, w1p, b1p, w2p, b2p)

    return jnp.sum(partials) * inv_n


def reference_loss(past_target, future_target, params):
    """Pure-JAX reference with matching bf16-matmul / f32-accumulate numerics."""
    w1, b1, w2, b2 = params
    h = jnp.dot(past_target.astype(jnp.bfloat16), w1.astype(jnp.bfloat16),
                preferred_element_type=jnp.float32)
    h = jnp.maximum(h + b1, 0.0)
    pred = jnp.dot(h.astype(jnp.bfloat16), w2.astype(jnp.bfloat16),
                   preferred_element_type=jnp.float32) + b2
    return jnp.mean((pred - future_target) ** 2)


if __name__ == "__main__":
    key = jax.random.PRNGKey(0)
    kp, kx, ky = jax.random.split(key, 3)

    params = init_params(kp)
    padded_params = prepare_params(params)

    past_target = jax.random.normal(kx, (BATCH, CONTEXT), jnp.float32)
    future_target = jax.random.normal(ky, (BATCH, PRED), jnp.float32)

    loss = example_train_network_forward(past_target, future_target, padded_params)
    loss = jax.block_until_ready(loss)

    ref = jax.block_until_ready(reference_loss(past_target, future_target, params))
    assert jnp.allclose(loss, ref, rtol=1e-3, atol=1e-5), (loss, ref)

    print("KERNEL_OK")
</pallas_src>

<mosaic_0001>
module attributes {stable_mosaic.version = 11 : i64} {
  func.func @train_loss_kernel(%arg0: i32, %arg1: memref<256x32xf32, #tpu.memory_space<vmem>>, %arg2: memref<256x16xf32, #tpu.memory_space<vmem>>, %arg3: memref<32x128xbf16, #tpu.memory_space<vmem>>, %arg4: memref<1x128xf32, #tpu.memory_space<vmem>>, %arg5: memref<128x16xbf16, #tpu.memory_space<vmem>>, %arg6: memref<1x16xf32, #tpu.memory_space<vmem>>, %arg7: memref<1x8x128xf32, #tpu.memory_space<vmem>>) attributes {dimension_semantics = [#tpu.dimension_semantics<parallel>], iteration_bounds = array<i64: 2>, scalar_prefetch = 0 : i64, scratch_operands = 0 : i64, tpu.core_type = #tpu.core_type<tc>, window_params = [{transform_indices = @transform_0, window_bounds = array<i64: 256, 32>}, {transform_indices = @transform_1, window_bounds = array<i64: 256, 16>}, {pipeline_mode = #tpu.pipeline_mode<synchronous>, transform_indices = @transform_2, window_bounds = array<i64: 32, 128>}, {pipeline_mode = #tpu.pipeline_mode<synchronous>, transform_indices = @transform_3, window_bounds = array<i64: 1, 128>}, {pipeline_mode = #tpu.pipeline_mode<synchronous>, transform_indices = @transform_4, window_bounds = array<i64: 128, 16>}, {pipeline_mode = #tpu.pipeline_mode<synchronous>, transform_indices = @transform_5, window_bounds = array<i64: 1, 16>}, {transform_indices = @transform_6, window_bounds = array<i64: 1, 8, 128>}]} {
    %c0 = arith.constant 0 : index
    %c0_0 = arith.constant 0 : index
    %0 = vector.load %arg1[%c0, %c0_0] : memref<256x32xf32, #tpu.memory_space<vmem>>, vector<256x32xf32>
    %1 = arith.truncf %0 : vector<256x32xf32> to vector<256x32xbf16>
    %c0_1 = arith.constant 0 : index
    %c0_2 = arith.constant 0 : index
    %2 = vector.load %arg3[%c0_1, %c0_2] : memref<32x128xbf16, #tpu.memory_space<vmem>>, vector<32x128xbf16>
    %cst = arith.constant dense<0.000000e+00> : vector<256x128xf32>
    %3 = tpu.matmul %1, %2, %cst {dimension_numbers = #tpu.dot_dimension_numbers<[1], [0], [0], [1], [0, 0, 1, 1], [], []>} : vector<256x32xbf16>, vector<32x128xbf16>, vector<256x128xf32> -> vector<256x128xf32>
    %c0_3 = arith.constant 0 : index
    %c0_4 = arith.constant 0 : index
    %4 = vector.load %arg4[%c0_3, %c0_4] : memref<1x128xf32, #tpu.memory_space<vmem>>, vector<1x128xf32>
    %5 = vector.broadcast %4 : vector<1x128xf32> to vector<256x128xf32>
    %6 = arith.addf %3, %5 : vector<256x128xf32>
    %cst_5 = arith.constant 0.000000e+00 : f32
    %7 = vector.broadcast %cst_5 : f32 to vector<256x128xf32>
    %8 = arith.maximumf %6, %7 : vector<256x128xf32>
    %9 = arith.truncf %8 : vector<256x128xf32> to vector<256x128xbf16>
    %c0_6 = arith.constant 0 : index
    %c0_7 = arith.constant 0 : index
    %10 = vector.load %arg5[%c0_6, %c0_7] : memref<128x16xbf16, #tpu.memory_space<vmem>>, vector<128x16xbf16>
    %cst_8 = arith.constant dense<0.000000e+00> : vector<256x16xf32>
    %11 = tpu.matmul %9, %10, %cst_8 {dimension_numbers = #tpu.dot_dimension_numbers<[1], [0], [0], [1], [0, 0, 1, 1], [], []>} : vector<256x128xbf16>, vector<128x16xbf16>, vector<256x16xf32> -> vector<256x16xf32>
    %c0_9 = arith.constant 0 : index
    %c0_10 = arith.constant 0 : index
    %12 = vector.load %arg6[%c0_9, %c0_10] : memref<1x16xf32, #tpu.memory_space<vmem>>, vector<1x16xf32>
    %13 = vector.broadcast %12 : vector<1x16xf32> to vector<256x16xf32>
    %14 = arith.addf %11, %13 : vector<256x16xf32>
    %c0_11 = arith.constant 0 : index
    %c0_12 = arith.constant 0 : index
    %15 = vector.load %arg2[%c0_11, %c0_12] : memref<256x16xf32, #tpu.memory_space<vmem>>, vector<256x16xf32>
    %16 = arith.subf %14, %15 : vector<256x16xf32>
    %17 = arith.mulf %16, %16 : vector<256x16xf32>
    %18 = vector.shape_cast %17 : vector<256x16xf32> to vector<1x256x16xf32>
    %cst_13 = arith.constant dense<0.000000e+00> : vector<1xf32>
    %19 = vector.multi_reduction <add>, %18, %cst_13 [1, 2] : vector<1x256x16xf32> to vector<1xf32>
    %20 = vector.shape_cast %19 : vector<1xf32> to vector<1x1x1xf32>
    %21 = vector.extract %20[0, 0, 0] : f32 from vector<1x1x1xf32>
    %22 = tpu.iota {dimensions = array<i32: 1>} : vector<1x8x128xi32>
    %23 = tpu.iota {dimensions = array<i32: 2>} : vector<1x8x128xi32>
    %c0_i32 = arith.constant 0 : i32
    %24 = vector.broadcast %c0_i32 : i32 to vector<1x8x128xi32>
    %25 = arith.cmpi eq, %22, %24 : vector<1x8x128xi32>
    %c0_i32_14 = arith.constant 0 : i32
    %26 = vector.broadcast %c0_i32_14 : i32 to vector<1x8x128xi32>
    %27 = arith.cmpi eq, %23, %26 : vector<1x8x128xi32>
    %28 = arith.andi %25, %27 : vector<1x8x128xi1>
    %cst_15 = arith.constant 0.000000e+00 : f32
    %29 = vector.broadcast %21 : f32 to vector<1x8x128xf32>
    %30 = vector.broadcast %cst_15 : f32 to vector<1x8x128xf32>
    %31 = arith.select %28, %29, %30 : vector<1x8x128xi1>, vector<1x8x128xf32>
    %c0_16 = arith.constant 0 : index
    %c0_17 = arith.constant 0 : index
    %c0_18 = arith.constant 0 : index
    %32 = vector.load %arg7[%c0_16, %c0_17, %c0_18] : memref<1x8x128xf32, #tpu.memory_space<vmem>>, vector<1x8x128xf32>
    tpu.vector_store %arg7[%c0_16, %c0_17, %c0_18], %31 {strides = array<i32>} : memref<1x8x128xf32, #tpu.memory_space<vmem>>, vector<1x8x128xf32>,
    return
  }
  func.func @transform_0(%arg0: i32) -> (i32, i32) {
    %c0_i32 = arith.constant 0 : i32
    %c0_i32_0 = arith.constant 0 : i32
    return %arg0, %c0_i32 : i32, i32
  }
  func.func @transform_1(%arg0: i32) -> (i32, i32) {
    %c0_i32 = arith.constant 0 : i32
    %c0_i32_0 = arith.constant 0 : i32
    return %arg0, %c0_i32 : i32, i32
  }
  func.func @transform_2(%arg0: i32) -> (i32, i32) {
    %c0_i32 = arith.constant 0 : i32
    %c0_i32_0 = arith.constant 0 : i32
    %c0_i32_1 = arith.constant 0 : i32
    return %c0_i32, %c0_i32_0 : i32, i32
  }
  func.func @transform_3(%arg0: i32) -> (i32, i32) {
    %c0_i32 = arith.constant 0 : i32
    %c0_i32_0 = arith.constant 0 : i32
    %c0_i32_1 = arith.constant 0 : i32
    return %c0_i32, %c0_i32_0 : i32, i32
  }
  func.func @transform_4(%arg0: i32) -> (i32, i32) {
    %c0_i32 = arith.constant 0 : i32
    %c0_i32_0 = arith.constant 0 : i32
    %c0_i32_1 = arith.constant 0 : i32
    return %c0_i32, %c0_i32_0 : i32, i32
  }
  func.func @transform_5(%arg0: i32) -> (i32, i32) {
    %c0_i32 = arith.constant 0 : i32
    %c0_i32_0 = arith.constant 0 : i32
    %c0_i32_1 = arith.constant 0 : i32
    return %c0_i32, %c0_i32_0 : i32, i32
  }
  func.func @transform_6(%arg0: i32) -> (i32, i32, i32) {
    %c0_i32 = arith.constant 0 : i32
    %c0_i32_0 = arith.constant 0 : i32
    %c0_i32_1 = arith.constant 0 : i32
    return %arg0, %c0_i32, %c0_i32_0 : i32, i32, i32
  }
}

</mosaic_0001>

<llo_original>
// kernel: example_train_network_forward.1
$region0: #{example_train_network_forward.1}
  #allocation0 [shape = 'u32[]', space=smem, size = 0x4, offset = 0x4, fixed_abs, tag = 'smem constant byte address 0x4 - core index']
  #allocation1 [shape = 'u32[144,128]{1,0:T(1,128)}', space=vmem, size = 0x12000, scoped, tag = 'internal scratch']
  %s0 = inlined_call_operand.vmem [shape: f32[512,32], index: 0, kind: input, shape index: {}]
  %s1 = inlined_call_operand.vmem [shape: f32[512,16], index: 1, kind: input, shape index: {}]
  %s2 = inlined_call_operand.vmem [shape: bf16[32,128], index: 2, kind: input, shape index: {}]
  %s3 = inlined_call_operand.vmem [shape: f32[1,128], index: 3, kind: input, shape index: {}]
  %s4 = inlined_call_operand.vmem [shape: bf16[128,16], index: 4, kind: input, shape index: {}]
  %s5 = inlined_call_operand.vmem [shape: f32[1,16], index: 5, kind: input, shape index: {}]
  %s6 = inlined_call_operand.vmem [shape: f32[2,8,128], index: 6, kind: output, shape index: {}]
  %s7 = sld [smem:[#allocation0]]
  $region57: #{example_train_network_forward.1} parent=0
    _
  %s9 = ssub.s32 1, %s7
  %s10 = scalar_select 0, %s9, %s7
  loop: start=0, step=1, limit=4
  $region2: #{example_train_network_forward.1} parent=0 // loop_pre_header
    _
  $region3: #{example_train_network_forward.1} parent=0 // loop_header
    %s12 = sphi 0, %s16
    %p13 = scmp.ge.s32.totalorder %s12, 4
    %s22 = sphi 0, %s24
    %s25 = sphi 0, %s22
    %s26 = sphi 0, %s25
    %s42 = sphi 0, %s26
    %s48 = sphi 0, %s50
    %s51 = sphi 0, %s48
    %s52 = sphi 0, %s51
    %s68 = sphi 0, %s52
    %s72 = sphi 0, %s72
    %s74 = sphi 0, %s72
    %s75 = sphi 0, %s74
    %s89 = sphi 0, %s75
    %s93 = sphi 0, %s93
    %s95 = sphi 0, %s93
    %s96 = sphi 0, %s95
    %s110 = sphi 0, %s96
    %s114 = sphi 0, %s114
    %s116 = sphi 0, %s114
    %s117 = sphi 0, %s116
    %s131 = sphi 0, %s117
    %s135 = sphi 0, %s135
    %s137 = sphi 0, %s135
    %s138 = sphi 0, %s137
    %s152 = sphi 0, %s138
    %s158 = sphi 0, %s160
    %s161 = sphi 0, %s158
    %s162 = sphi 0, %s161
    %s178 = sphi 0, %s162
  $region4: #{example_train_network_forward.1} parent=0 // loop_header_branch
    %15 = sbr.rel (%p13) target = $region8
  $region5: #{example_train_network_forward.1} parent=0 // loop_body
    %s17 = ssub.s32 %s12, 1
    %s18 = ssub.s32 %s12, 2
    %s19 = sadd.s32 %s12, 1
    %s20 = ssub.s32 %s12, %s19
    %p21 = scmp.eq.s32.totalorder %s20, 0
    %s23 = sadd.s32 %s22, 1
    %s24 = scalar_select %p21, %s22, %s23
    %p27 = pneg %p21
    %p28 = scmp.eq.s32.totalorder %s12, 1
    %p29 = por %p27, %p28
    %p30 = scmp.ne.s32.totalorder %s22, %s25
    %p31 = scmp.eq.s32.totalorder %s12, 0
    %p32 = por %p30, %p31
    %p33 = scmp.ne.s32.totalorder %s22, %s25
    %p34 = scmp.eq.s32.totalorder %s17, 1
    %p35 = por %p33, %p34
    %p36 = scmp.ne.s32.totalorder %s25, %s26
    %p37 = scmp.eq.s32.totalorder %s17, 0
    %p38 = por %p36, %p37
    %p39 = scmp.ne.s32.totalorder %s25, %s26
    %p40 = scmp.eq.s32.totalorder %s18, 1
    %p41 = por %p39, %p40
    %p43 = scmp.ne.s32.totalorder %s26, %s42
    %p44 = scmp.eq.s32.totalorder %s18, 0
    %p45 = por %p43, %p44
    %s46 = ssub.s32 %s12, %s19
    %p47 = scmp.eq.s32.totalorder %s46, 0
    %s49 = sadd.s32 %s48, 1
    %s50 = scalar_select %p47, %s48, %s49
    %p53 = pneg %p47
    %p54 = scmp.eq.s32.totalorder %s12, 1
    %p55 = por %p53, %p54
    %p56 = scmp.ne.s32.totalorder %s48, %s51
    %p57 = scmp.eq.s32.totalorder %s12, 0
    %p58 = por %p56, %p57
    %p59 = scmp.ne.s32.totalorder %s48, %s51
    %p60 = scmp.eq.s32.totalorder %s17, 1
    %p61 = por %p59, %p60
    %p62 = scmp.ne.s32.totalorder %s51, %s52
    %p63 = scmp.eq.s32.totalorder %s17, 0
    %p64 = por %p62, %p63
    %p65 = scmp.ne.s32.totalorder %s51, %s52
    %p66 = scmp.eq.s32.totalorder %s18, 1
    %p67 = por %p65, %p66
    %p69 = scmp.ne.s32.totalorder %s52, %s68
    %p70 = scmp.eq.s32.totalorder %s18, 0
    %p71 = por %p69, %p70
    %s73 = sadd.s32 %s72, 1
    %p76 = scmp.eq.s32.totalorder %s12, 1
    %p77 = scmp.ne.s32.totalorder %s72, %s74
    %p78 = scmp.eq.s32.totalorder %s12, 0
    %p79 = por %p77, %p78
    %p80 = scmp.ne.s32.totalorder %s72, %s74
    %p81 = scmp.eq.s32.totalorder %s17, 1
    %p82 = por %p80, %p81
    %p83 = scmp.ne.s32.totalorder %s74, %s75
    %p84 = scmp.eq.s32.totalorder %s17, 0
    %p85 = por %p83, %p84
    %p86 = scmp.ne.s32.totalorder %s74, %s75
    %p87 = scmp.eq.s32.totalorder %s18, 1
    %p88 = por %p86, %p87
    %p90 = scmp.ne.s32.totalorder %s75, %s89
    %p91 = scmp.eq.s32.totalorder %s18, 0
    %p92 = por %p90, %p91
    %s94 = sadd.s32 %s93, 1
    %p97 = scmp.eq.s32.totalorder %s12, 1
    %p98 = scmp.ne.s32.totalorder %s93, %s95
    %p99 = scmp.eq.s32.totalorder %s12, 0
    %p100 = por %p98, %p99
    %p101 = scmp.ne.s32.totalorder %s93, %s95
    %p102 = scmp.eq.s32.totalorder %s17, 1
    %p103 = por %p101, %p102
    %p104 = scmp.ne.s32.totalorder %s95, %s96
    %p105 = scmp.eq.s32.totalorder %s17, 0
    %p106 = por %p104, %p105
    %p107 = scmp.ne.s32.totalorder %s95, %s96
    %p108 = scmp.eq.s32.totalorder %s18, 1
    %p109 = por %p107, %p108
    %p111 = scmp.ne.s32.totalorder %s96, %s110
    %p112 = scmp.eq.s32.totalorder %s18, 0
    %p113 = por %p111, %p112
    %s115 = sadd.s32 %s114, 1
    %p118 = scmp.eq.s32.totalorder %s12, 1
    %p119 = scmp.ne.s32.totalorder %s114, %s116
    %p120 = scmp.eq.s32.totalorder %s12, 0
    %p121 = por %p119, %p120
    %p122 = scmp.ne.s32.totalorder %s114, %s116
    %p123 = scmp.eq.s32.totalorder %s17, 1
    %p124 = por %p122, %p123
    %p125 = scmp.ne.s32.totalorder %s116, %s117
    %p126 = scmp.eq.s32.totalorder %s17, 0
    %p127 = por %p125, %p126
    %p128 = scmp.ne.s32.totalorder %s116, %s117
    %p129 = scmp.eq.s32.totalorder %s18, 1
    %p130 = por %p128, %p129
    %p132 = scmp.ne.s32.totalorder %s117, %s131
    %p133 = scmp.eq.s32.totalorder %s18, 0
    %p134 = por %p132, %p133
    %s136 = sadd.s32 %s135, 1
    %p139 = scmp.eq.s32.totalorder %s12, 1
    %p140 = scmp.ne.s32.totalorder %s135, %s137
    %p141 = scmp.eq.s32.totalorder %s12, 0
    %p142 = por %p140, %p141
    %p143 = scmp.ne.s32.totalorder %s135, %s137
    %p144 = scmp.eq.s32.totalorder %s17, 1
    %p145 = por %p143, %p144
    %p146 = scmp.ne.s32.totalorder %s137, %s138
    %p147 = scmp.eq.s32.totalorder %s17, 0
    %p148 = por %p146, %p147
    %p149 = scmp.ne.s32.totalorder %s137, %s138
    %p150 = scmp.eq.s32.totalorder %s18, 1
    %p151 = por %p149, %p150
    %p153 = scmp.ne.s32.totalorder %s138, %s152
    %p154 = scmp.eq.s32.totalorder %s18, 0
    %p155 = por %p153, %p154
    %s156 = ssub.s32 %s12, %s19
    %p157 = scmp.eq.s32.totalorder %s156, 0
    %s159 = sadd.s32 %s158, 1
    %s160 = scalar_select %p157, %s158, %s159
    %p163 = pneg %p157
    %p164 = scmp.eq.s32.totalorder %s12, 1
    %p165 = por %p163, %p164
    %p166 = scmp.ne.s32.totalorder %s158, %s161
    %p167 = scmp.eq.s32.totalorder %s12, 0
    %p168 = por %p166, %p167
    %p169 = scmp.ne.s32.totalorder %s158, %s161
    %p170 = scmp.eq.s32.totalorder %s17, 1
    %p171 = por %p169, %p170
    %p172 = scmp.ne.s32.totalorder %s161, %s162
    %p173 = scmp.eq.s32.totalorder %s17, 0
    %p174 = por %p172, %p173
    %p175 = scmp.ne.s32.totalorder %s161, %s162
    %p176 = scmp.eq.s32.totalorder %s18, 1
    %p177 = por %p175, %p176
    %p179 = scmp.ne.s32.totalorder %s162, %s178
    %p180 = scmp.eq.s32.totalorder %s18, 0
    %p181 = por %p179, %p180
    %p182 = scmp.le.s32.totalorder 1, %s12
    %p183 = scmp.lt.s32.totalorder %s12, 3
    %p184 = pnand %p182, %p183
    %p185 = pneg %p184
    // Predicated region
    $region9: #{example_train_network_forward.1} parent=5 // pred_check
      _
    $region10: #{example_train_network_forward.1} parent=5 // pred_check_branch
      %187 = sbr.rel (%p184) target = $region12
    $region11: #{example_train_network_forward.1} parent=5 // pred_region
      %s188 = ssub.s32 %s12, 1
      // Predicated region
      $region13: #{example_train_network_forward.1} parent=11 // pred_check
        %p189 = pneg %p85
      $region14: #{example_train_network_forward.1} parent=11 // pred_check_branch
        %191 = sbr.rel (%p189) target = $region16
      $region15: #{example_train_network_forward.1} parent=11 // pred_region
        _
      $region16: #{example_train_network_forward.1} parent=11 // pred_fallthru
        _
      // Predicated region
      $region17: #{example_train_network_forward.1} parent=11 // pred_check
        %p192 = pneg %p106
      $region18: #{example_train_network_forward.1} parent=11 // pred_check_branch
        %194 = sbr.rel (%p192) target = $region20
      $region19: #{example_train_network_forward.1} parent=11 // pred_region
        _
      $region20: #{example_train_network_forward.1} parent=11 // pred_fallthru
        _
      // Predicated region
      $region21: #{example_train_network_forward.1} parent=11 // pred_check
        %p195 = pneg %p127
      $region22: #{example_train_network_forward.1} parent=11 // pred_check_branch
        %197 = sbr.rel (%p195) target = $region24
      $region23: #{example_train_network_forward.1} parent=11 // pred_region
        _
      $region24: #{example_train_network_forward.1} parent=11 // pred_fallthru
        _
      // Predicated region
      $region25: #{example_train_network_forward.1} parent=11 // pred_check
        %p198 = pneg %p148
      $region26: #{example_train_network_forward.1} parent=11 // pred_check_branch
        %200 = sbr.rel (%p198) target = $region28
      $region27: #{example_train_network_forward.1} parent=11 // pred_region
        _
      $region28: #{example_train_network_forward.1} parent=11 // pred_fallthru
        _
    $region12: #{example_train_network_forward.1} parent=5 // pred_fallthru
      _
    %p201 = scmp.lt.s32.totalorder %s12, 2
    // Predicated region
    $region29: #{example_train_network_forward.1} parent=5 // pred_check
      %p202 = pneg %p201
    $region30: #{example_train_network_forward.1} parent=5 // pred_check_branch
      %204 = sbr.rel (%p202) target = $region32
    $region31: #{example_train_network_forward.1} parent=5 // pred_region
      // Predicated region
      $region33: #{example_train_network_forward.1} parent=31 // pred_check
        %p205 = pneg %p32
      $region34: #{example_train_network_forward.1} parent=31 // pred_check_branch
        %207 = sbr.rel (%p205) target = $region36
      $region35: #{example_train_network_forward.1} parent=31 // pred_region
        %s208 = smul.u32 32, %s12
        %p209 = scmp.lt.s32.totalorder %s208, 63
        %s210 = scalar_select %p209, %s208, 63
        %s211 = smul.addr %s210, 8
        %s212 = scalar_lea.vmem %s0, %s211
        %s213 = smul.u32 32, %s12
      $region36: #{example_train_network_forward.1} parent=31 // pred_fallthru
        _
      // Predicated region
      $region37: #{example_train_network_forward.1} parent=31 // pred_check
        %p214 = pneg %p58
      $region38: #{example_train_network_forward.1} parent=31 // pred_check_branch
        %216 = sbr.rel (%p214) target = $region40
      $region39: #{example_train_network_forward.1} parent=31 // pred_region
        %s217 = smul.u32 32, %s12
        %p218 = scmp.lt.s32.totalorder %s217, 63
        %s219 = scalar_select %p218, %s217, 63
        %s220 = smul.addr %s219, 8
        %s221 = scalar_lea.vmem %s1, %s220
        %s222 = smul.u32 32, %s12
      $region40: #{example_train_network_forward.1} parent=31 // pred_fallthru
        _
    $region32: #{example_train_network_forward.1} parent=5 // pred_fallthru
      _
    %p223 = scmp.le.s32.totalorder 1, %s12
    %p224 = scmp.lt.s32.totalorder %s12, 3
    %p225 = pnand %p223, %p224
    %p226 = pneg %p225
    // Predicated region
    $region41: #{example_train_network_forward.1} parent=5 // pred_check
      _
    $region42: #{example_train_network_forward.1} parent=5 // pred_check_branch
      %228 = sbr.rel (%p225) target = $region44
    $region43: #{example_train_network_forward.1} parent=5 // pred_region
      %s229 = ssub.s32 %s12, 1
      %s230 = smul.u32 32, %s17
      %p231 = scmp.lt.s32.totalorder %s230, 63
      %s232 = scalar_select %p231, %s230, 63
      %s233 = smul.addr %s232, 8
      %s234 = scalar_lea.vmem %s0, %s233
      %p235 = pneg %p38
      %p236 = pneg %p35
      %s237 = smul.u32 32, %s17
      %p238 = scmp.lt.s32.totalorder %s237, 63
      %s239 = scalar_select %p238, %s237, 63
      %s240 = smul.addr %s239, 8
      %s241 = scalar_lea.vmem %s1, %s240
      %p242 = pneg %p64
      %p243 = pneg %p61
      %p244 = pneg %p85
      %p245 = pneg %p82
      %p246 = pneg %p106
      %p247 = pneg %p103
      %p248 = pneg %p127
      %p249 = pneg %p124
      %p250 = pneg %p148
      %p251 = pneg %p145
      %p252 = pneg %p174
      %p253 = pneg %p171
      %p254 = scmp.lt.s32.totalorder %s17, 1
      %s255 = scalar_select %p254, %s17, 1
      %s256 = smul.addr %s255, 8
      %s257 = scalar_lea.vmem %s6, %s256
      %s258 = smul.u32 32, %s17
      %p259 = scmp.lt.s32.totalorder %s258, 63
      %s260 = scalar_select %p259, %s258, 63
      %s261 = smul.addr %s260, 8
      %s262 = scalar_lea.vmem %s0, %s261
      %s263 = smul.u32 32, %s17
      %s264 = smul.u32 32, %s17
      %p265 = scmp.lt.s32.totalorder %s264, 63
      %s266 = scalar_select %p265, %s264, 63
      %s267 = smul.addr %s266, 8
      %s268 = scalar_lea.vmem %s1, %s267
      %s269 = smul.u32 32, %s17
      %p270 = scmp.lt.s32.totalorder %s17, 1
      %s271 = scalar_select %p270, %s17, 1
      %s272 = smul.addr %s271, 8
      %s273 = scalar_lea.vmem %s6, %s272
      %v275 = vld [vmem:[%s262] sm:$0xff]
      %v276 = vld [vmem:[%s262 + $0x8] sm:$0xff]
      %v277 = vld [vmem:[%s262 + $0x10] sm:$0xff]
      %v278 = vld [vmem:[%s262 + $0x18] sm:$0xff]
      %v279 = vld [vmem:[%s262 + $0x20] sm:$0xff]
      %v280 = vld [vmem:[%s262 + $0x28] sm:$0xff]
      %v281 = vld [vmem:[%s262 + $0x30] sm:$0xff]
      %v282 = vld [vmem:[%s262 + $0x38] sm:$0xff]
      %v283 = vld [vmem:[%s262 + $0x40] sm:$0xff]
      %v284 = vld [vmem:[%s262 + $0x48] sm:$0xff]
      %v285 = vld [vmem:[%s262 + $0x50] sm:$0xff]
      %v286 = vld [vmem:[%s262 + $0x58] sm:$0xff]
      %v287 = vld [vmem:[%s262 + $0x60] sm:$0xff]
      %v288 = vld [vmem:[%s262 + $0x68] sm:$0xff]
      %v289 = vld [vmem:[%s262 + $0x70] sm:$0xff]
      %v290 = vld [vmem:[%s262 + $0x78] sm:$0xff]
      %v291 = vld [vmem:[%s262 + $0x80] sm:$0xff]
      %v292 = vld [vmem:[%s262 + $0x88] sm:$0xff]
      %v293 = vld [vmem:[%s262 + $0x90] sm:$0xff]
      %v294 = vld [vmem:[%s262 + $0x98] sm:$0xff]
      %v295 = vld [vmem:[%s262 + $0xa0] sm:$0xff]
      %v296 = vld [vmem:[%s262 + $0xa8] sm:$0xff]
      %v297 = vld [vmem:[%s262 + $0xb0] sm:$0xff]
      %v298 = vld [vmem:[%s262 + $0xb8] sm:$0xff]
      %v299 = vld [vmem:[%s262 + $0xc0] sm:$0xff]
      %v300 = vld [vmem:[%s262 + $0xc8] sm:$0xff]
      %v301 = vld [vmem:[%s262 + $0xd0] sm:$0xff]
      %v302 = vld [vmem:[%s262 + $0xd8] sm:$0xff]
      %v303 = vld [vmem:[%s262 + $0xe0] sm:$0xff]
      %v304 = vld [vmem:[%s262 + $0xe8] sm:$0xff]
      %v305 = vld [vmem:[%s262 + $0xf0] sm:$0xff]
      %v306 = vld [vmem:[%s262 + $0xf8] sm:$0xff]
      %v307 = vpack.c.bf16 %v276, %v275
      %v308 = vpack.c.bf16 %v278, %v277
      %v309 = vpack.c.bf16 %v280, %v279
      %v310 = vpack.c.bf16 %v282, %v281
      %v311 = vpack.c.bf16 %v284, %v283
      %v312 = vpack.c.bf16 %v286, %v285
      %v313 = vpack.c.bf16 %v288, %v287
      %v314 = vpack.c.bf16 %v290, %v289
      %v315 = vpack.c.bf16 %v292, %v291
      %v316 = vpack.c.bf16 %v294, %v293
      %v317 = vpack.c.bf16 %v296, %v295
      %v318 = vpack.c.bf16 %v298, %v297
      %v319 = vpack.c.bf16 %v300, %v299
      %v320 = vpack.c.bf16 %v302, %v301
      %v321 = vpack.c.bf16 %v304, %v303
      %v322 = vpack.c.bf16 %v306, %v305
      %v323 = vld [vmem:[%s2] sm:$0xf]
      %v324 = vld [vmem:[%s2 + $0x4] sm:$0xf]
      %v325 = vld [vmem:[%s2 + $0x8] sm:$0xf]
      %v326 = vld [vmem:[%s2 + $0xc] sm:$0xf]
      %v327 = vld [vmem:[%s3] sm:$0x1]
      %v329 = vlaneseq
      %v330 = vshrl.u32 %v329, 7
      %v331 = vsub.s32 0, %v330
      %v332 = vrot.slane %v327, %v331
      %v338 = vunpack.c.l.b16 %v323
      %v339 = vunpack.c.l.b16 %v324
      %v340 = vunpack.c.l.b16 %v325
      %v341 = vunpack.c.l.b16 %v326
      %v342 = vpack.c.b16 %v339, %v338
      %v343 = vpack.c.b16 %v341, %v340
      %vm346 = vcmask 261120
      %v348 = vsel %vm346, %v307, 0
      %v351 = vsel %vm346, %v308, 0
      %v354 = vsel %vm346, %v309, 0
      %v357 = vsel %vm346, %v310, 0
      %v360 = vsel %vm346, %v311, 0
      %v363 = vsel %vm346, %v312, 0
      %v366 = vsel %vm346, %v313, 0
      %v369 = vsel %vm346, %v314, 0
      %v372 = vsel %vm346, %v315, 0
      %v375 = vsel %vm346, %v316, 0
      %v378 = vsel %vm346, %v317, 0
      %v381 = vsel %vm346, %v318, 0
      %v384 = vsel %vm346, %v319, 0
      %v387 = vsel %vm346, %v320, 0
      %v390 = vsel %vm346, %v321, 0
      %v393 = vsel %vm346, %v322, 0
      %395 = vmatprep.subr.bf16.mxu0 0
      %396 = vmatpush1.bf16.msra.mxu0 %v342
      %397 = vmatprep.subr.bf16.mxu0 0
      %398 = vmatpush1.bf16.msra.mxu0 %v343
      %399 = vmatprep.subr.bf16.mxu0 0
      %400 = vmatpush1.bf16.msra.mxu0 0
      %401 = vmatprep.subr.bf16.mxu0 0
      %402 = vmatpush1.bf16.msra.mxu0 0
      %403 = vmatprep.subr.bf16.mxu0 0
      %404 = vmatpush1.bf16.msra.mxu0 0
      %405 = vmatprep.subr.bf16.mxu0 0
      %406 = vmatpush1.bf16.msra.mxu0 0
      %407 = vmatprep.subr.bf16.mxu0 0
      %408 = vmatpush1.bf16.msra.mxu0 0
      %409 = vmatprep.subr.bf16.mxu0 0
      %410 = vmatpush1.bf16.msra.mxu0 0
      %411 = vmatprep.subr.bf16.mxu0 0
      %412 = vmatpush1.bf16.msra.mxu0 0
      %413 = vmatprep.subr.bf16.mxu0 0
      %414 = vmatpush1.bf16.msra.mxu0 0
      %415 = vmatprep.subr.bf16.mxu0 0
      %416 = vmatpush1.bf16.msra.mxu0 0
      %417 = vmatprep.subr.bf16.mxu0 0
      %418 = vmatpush1.bf16.msra.mxu0 0
      %419 = vmatprep.subr.bf16.mxu0 0
      %420 = vmatpush1.bf16.msra.mxu0 0
      %421 = vmatprep.subr.bf16.mxu0 0
      %422 = vmatpush1.bf16.msra.mxu0 0
      %423 = vmatprep.subr.bf16.mxu0 0
      %424 = vmatpush1.bf16.msra.mxu0 0
      %425 = vmatprep.subr.bf16.mxu0 0
      %426 = vmatpush1.bf16.msra.mxu0 0
      %427 = vmatprep.mubr.bf16.mxu0 0
      %428 = vmatmul.mubr.bf16.gmra.mrb[0].mxu0 %v348
      %v429 = vpop.f32.mrb[0].mxu0
      %v430 = vadd.f32 %v332, %v429
      %v431 = vpop.f32.mrb[0].mxu0
      %v432 = vpop.f32.mrb[0].mxu0
      %v433 = vadd.f32 %v332, %v432
      %v434 = vpop.f32.mrb[0].mxu0
      %435 = vmatprep.mubr.bf16.mxu0 0
      %436 = vmatmul.mubr.bf16.gmra.mrb[0].mxu0 %v351
      %v437 = vpop.f32.mrb[0].mxu0
      %v438 = vadd.f32 %v332, %v437
      %v439 = vpop.f32.mrb[0].mxu0
      %v440 = vpop.f32.mrb[0].mxu0
      %v441 = vadd.f32 %v332, %v440
      %v442 = vpop.f32.mrb[0].mxu0
      %443 = vmatprep.mubr.bf16.mxu0 0
      %444 = vmatmul.mubr.bf16.gmra.mrb[0].mxu0 %v354
      %v445 = vpop.f32.mrb[0].mxu0
      %v446 = vadd.f32 %v332, %v445
      %v447 = vpop.f32.mrb[0].mxu0
      %v448 = vpop.f32.mrb[0].mxu0
      %v449 = vadd.f32 %v332, %v448
      %v450 = vpop.f32.mrb[0].mxu0
      %451 = vmatprep.mubr.bf16.mxu0 0
      %452 = vmatmul.mubr.bf16.gmra.mrb[0].mxu0 %v357
      %v453 = vpop.f32.mrb[0].mxu0
      %v454 = vadd.f32 %v332, %v453
      %v455 = vpop.f32.mrb[0].mxu0
      %v456 = vpop.f32.mrb[0].mxu0
      %v457 = vadd.f32 %v332, %v456
      %v458 = vpop.f32.mrb[0].mxu0
      %459 = vmatprep.mubr.bf16.mxu0 0
      %460 = vmatmul.mubr.bf16.gmra.mrb[0].mxu0 %v360
      %v461 = vpop.f32.mrb[0].mxu0
      %v462 = vadd.f32 %v332, %v461
      %v463 = vpop.f32.mrb[0].mxu0
      %v464 = vpop.f32.mrb[0].mxu0
      %v465 = vadd.f32 %v332, %v464
      %v466 = vpop.f32.mrb[0].mxu0
      %467 = vmatprep.mubr.bf16.mxu0 0
      %468 = vmatmul.mubr.bf16.gmra.mrb[0].mxu0 %v363
      %v469 = vpop.f32.mrb[0].mxu0
      %v470 = vadd.f32 %v332, %v469
      %v471 = vpop.f32.mrb[0].mxu0
      %v472 = vpop.f32.mrb[0].mxu0
      %v473 = vadd.f32 %v332, %v472
      %v474 = vpop.f32.mrb[0].mxu0
      %475 = vmatprep.mubr.bf16.mxu0 0
      %476 = vmatmul.mubr.bf16.gmra.mrb[0].mxu0 %v366
      %v477 = vpop.f32.mrb[0].mxu0
      %v478 = vadd.f32 %v332, %v477
      %v479 = vpop.f32.mrb[0].mxu0
      %v480 = vpop.f32.mrb[0].mxu0
      %v481 = vadd.f32 %v332, %v480
      %v482 = vpop.f32.mrb[0].mxu0
      %483 = vmatprep.mubr.bf16.mxu0 0
      %484 = vmatmul.mubr.bf16.gmra.mrb[0].mxu0 %v369
      %v485 = vpop.f32.mrb[0].mxu0
      %v486 = vadd.f32 %v332, %v485
      %v487 = vpop.f32.mrb[0].mxu0
      %v488 = vpop.f32.mrb[0].mxu0
      %v489 = vadd.f32 %v332, %v488
      %v490 = vpop.f32.mrb[0].mxu0
      %491 = vmatprep.mubr.bf16.mxu0 0
      %492 = vmatmul.mubr.bf16.gmra.mrb[0].mxu0 %v372
      %v493 = vpop.f32.mrb[0].mxu0
      %v494 = vadd.f32 %v332, %v493
      %v495 = vpop.f32.mrb[0].mxu0
      %v496 = vpop.f32.mrb[0].mxu0
      %v497 = vadd.f32 %v332, %v496
      %v498 = vpop.f32.mrb[0].mxu0
      %499 = vmatprep.mubr.bf16.mxu0 0
      %500 = vmatmul.mubr.bf16.gmra.mrb[0].mxu0 %v375
      %v501 = vpop.f32.mrb[0].mxu0
      %v502 = vadd.f32 %v332, %v501
      %v503 = vpop.f32.mrb[0].mxu0
      %v504 = vpop.f32.mrb[0].mxu0
      %v505 = vadd.f32 %v332, %v504
      %v506 = vpop.f32.mrb[0].mxu0
      %507 = vmatprep.mubr.bf16.mxu0 0
      %508 = vmatmul.mubr.bf16.gmra.mrb[0].mxu0 %v378
      %v509 = vpop.f32.mrb[0].mxu0
      %v510 = vadd.f32 %v332, %v509
      %v511 = vpop.f32.mrb[0].mxu0
      %v512 = vpop.f32.mrb[0].mxu0
      %v513 = vadd.f32 %v332, %v512
      %v514 = vpop.f32.mrb[0].mxu0
      %515 = vmatprep.mubr.bf16.mxu0 0
      %516 = vmatmul.mubr.bf16.gmra.mrb[0].mxu0 %v381
      %v517 = vpop.f32.mrb[0].mxu0
      %v518 = vadd.f32 %v332, %v517
      %v519 = vpop.f32.mrb[0].mxu0
      %v520 = vpop.f32.mrb[0].mxu0
      %v521 = vadd.f32 %v332, %v520
      %v522 = vpop.f32.mrb[0].mxu0
      %523 = vmatprep.mubr.bf16.mxu0 0
      %524 = vmatmul.mubr.bf16.gmra.mrb[0].mxu0 %v384
      %v525 = vpop.f32.mrb[0].mxu0
      %v526 = vadd.f32 %v332, %v525
      %v527 = vpop.f32.mrb[0].mxu0
      %v528 = vpop.f32.mrb[0].mxu0
      %v529 = vadd.f32 %v332, %v528
      %v530 = vpop.f32.mrb[0].mxu0
      %531 = vmatprep.mubr.bf16.mxu0 0
      %532 = vmatmul.mubr.bf16.gmra.mrb[0].mxu0 %v387
      %v533 = vpop.f32.mrb[0].mxu0
      %v534 = vadd.f32 %v332, %v533
      %v535 = vpop.f32.mrb[0].mxu0
      %v536 = vpop.f32.mrb[0].mxu0
      %v537 = vadd.f32 %v332, %v536
      %v538 = vpop.f32.mrb[0].mxu0
      %539 = vmatprep.mubr.bf16.mxu0 0
      %540 = vmatmul.mubr.bf16.gmra.mrb[0].mxu0 %v390
      %v541 = vpop.f32.mrb[0].mxu0
      %v542 = vadd.f32 %v332, %v541
      %v543 = vpop.f32.mrb[0].mxu0
      %v544 = vpop.f32.mrb[0].mxu0
      %v545 = vadd.f32 %v332, %v544
      %v546 = vpop.f32.mrb[0].mxu0
      %547 = vmatprep.mubr.bf16.mxu0 0
      %548 = vmatmul.mubr.bf16.gmra.mrb[0].mxu0 %v393
      %v549 = vpop.f32.mrb[0].mxu0
      %v550 = vadd.f32 %v332, %v549
      %v551 = vpop.f32.mrb[0].mxu0
      %v552 = vpop.f32.mrb[0].mxu0
      %v553 = vadd.f32 %v332, %v552
      %v554 = vpop.f32.mrb[0].mxu0
      %555 = vdwg.mxu0
      %v556 = vmax.f32 %v430, 0.0
      %v557 = vmax.f32 %v433, 0.0
      %v558 = vmax.f32 %v438, 0.0
      %v559 = vmax.f32 %v441, 0.0
      %v560 = vmax.f32 %v446, 0.0
      %v561 = vmax.f32 %v449, 0.0
      %v562 = vmax.f32 %v454, 0.0
      %v563 = vmax.f32 %v457, 0.0
      %v564 = vmax.f32 %v462, 0.0
      %v565 = vmax.f32 %v465, 0.0
      %v566 = vmax.f32 %v470, 0.0
      %v567 = vmax.f32 %v473, 0.0
      %v568 = vmax.f32 %v478, 0.0
      %v569 = vmax.f32 %v481, 0.0
      %v570 = vmax.f32 %v486, 0.0
      %v571 = vmax.f32 %v489, 0.0
      %v572 = vmax.f32 %v494, 0.0
      %v573 = vmax.f32 %v497, 0.0
      %v574 = vmax.f32 %v502, 0.0
      %v575 = vmax.f32 %v505, 0.0
      %v576 = vmax.f32 %v510, 0.0
      %v577 = vmax.f32 %v513, 0.0
      %v578 = vmax.f32 %v518, 0.0
      %v579 = vmax.f32 %v521, 0.0
      %v580 = vmax.f32 %v526, 0.0
      %v581 = vmax.f32 %v529, 0.0
      %v582 = vmax.f32 %v534, 0.0
      %v583 = vmax.f32 %v537, 0.0
      %v584 = vmax.f32 %v542, 0.0
      %v585 = vmax.f32 %v545, 0.0
      %v586 = vmax.f32 %v550, 0.0
      %v587 = vmax.f32 %v553, 0.0
      %v588 = vpack.c.bf16 %v557, %v556
      %v589 = vpack.c.bf16 %v559, %v558
      %v590 = vpack.c.bf16 %v561, %v560
      %v591 = vpack.c.bf16 %v563, %v562
      %v592 = vpack.c.bf16 %v565, %v564
      %v593 = vpack.c.bf16 %v567, %v566
      %v594 = vpack.c.bf16 %v569, %v568
      %v595 = vpack.c.bf16 %v571, %v570
      %v596 = vpack.c.bf16 %v573, %v572
      %v597 = vpack.c.bf16 %v575, %v574
      %v598 = vpack.c.bf16 %v577, %v576
      %v599 = vpack.c.bf16 %v579, %v578
      %v600 = vpack.c.bf16 %v581, %v580
      %v601 = vpack.c.bf16 %v583, %v582
      %v602 = vpack.c.bf16 %v585, %v584
      %v603 = vpack.c.bf16 %v587, %v586
      %v604 = vld [vmem:[%s4] sm:$0xf]
      %v605 = vld [vmem:[%s4 + $0x4] sm:$0xf]
      %v606 = vld [vmem:[%s4 + $0x8] sm:$0xf]
      %v607 = vld [vmem:[%s4 + $0xc] sm:$0xf]
      %v608 = vld [vmem:[%s4 + $0x10] sm:$0xf]
      %v609 = vld [vmem:[%s4 + $0x14] sm:$0xf]
      %v610 = vld [vmem:[%s4 + $0x18] sm:$0xf]
      %v611 = vld [vmem:[%s4 + $0x1c] sm:$0xf]
      %v612 = vld [vmem:[%s4 + $0x20] sm:$0xf]
      %v613 = vld [vmem:[%s4 + $0x24] sm:$0xf]
      %v614 = vld [vmem:[%s4 + $0x28] sm:$0xf]
      %v615 = vld [vmem:[%s4 + $0x2c] sm:$0xf]
      %v616 = vld [vmem:[%s4 + $0x30] sm:$0xf]
      %v617 = vld [vmem:[%s4 + $0x34] sm:$0xf]
      %v618 = vld [vmem:[%s4 + $0x38] sm:$0xf]
      %v619 = vld [vmem:[%s4 + $0x3c] sm:$0xf]
      %v620 = vld [vmem:[%s5] sm:$0x1]
      %v622 = vlaneseq
      %v623 = vshrl.u32 %v622, 7
      %v624 = vsub.s32 0, %v623
      %v625 = vrot.slane %v620, %v624
      %v643 = vunpack.c.l.b16 %v604
      %v644 = vunpack.c.l.b16 %v605
      %v645 = vunpack.c.l.b16 %v606
      %v646 = vunpack.c.l.b16 %v607
      %v647 = vunpack.c.l.b16 %v608
      %v648 = vunpack.c.l.b16 %v609
      %v649 = vunpack.c.l.b16 %v610
      %v650 = vunpack.c.l.b16 %v611
      %v651 = vunpack.c.l.b16 %v612
      %v652 = vunpack.c.l.b16 %v613
      %v653 = vunpack.c.l.b16 %v614
      %v654 = vunpack.c.l.b16 %v615
      %v655 = vunpack.c.l.b16 %v616
      %v656 = vunpack.c.l.b16 %v617
      %v657 = vunpack.c.l.b16 %v618
      %v658 = vunpack.c.l.b16 %v619
      %v659 = vpack.c.b16 %v644, %v643
      %v660 = vpack.c.b16 %v646, %v645
      %v661 = vpack.c.b16 %v648, %v647
      %v662 = vpack.c.b16 %v650, %v649
      %v663 = vpack.c.b16 %v652, %v651
      %v664 = vpack.c.b16 %v654, %v653
      %v665 = vpack.c.b16 %v656, %v655
      %v666 = vpack.c.b16 %v658, %v657
      %675 = vmatprep.subr.bf16.mxu0 0
      %676 = vmatpush1.bf16.msra.mxu0 %v659
      %677 = vmatprep.subr.bf16.mxu0 0
      %678 = vmatpush1.bf16.msra.mxu0 %v660
      %679 = vmatprep.subr.bf16.mxu0 0
      %680 = vmatpush1.bf16.msra.mxu0 %v661
      %681 = vmatprep.subr.bf16.mxu0 0
      %682 = vmatpush1.bf16.msra.mxu0 %v662
      %683 = vmatprep.subr.bf16.mxu0 0
      %684 = vmatpush1.bf16.msra.mxu0 %v663
      %685 = vmatprep.subr.bf16.mxu0 0
      %686 = vmatpush1.bf16.msra.mxu0 %v664
      %687 = vmatprep.subr.bf16.mxu0 0
      %688 = vmatpush1.bf16.msra.mxu0 %v665
      %689 = vmatprep.subr.bf16.mxu0 0
      %690 = vmatpush1.bf16.msra.mxu0 %v666
      %691 = vmatprep.subr.bf16.mxu0 0
      %692 = vmatpush1.bf16.msra.mxu0 0
      %693 = vmatprep.subr.bf16.mxu0 0
      %694 = vmatpush1.bf16.msra.mxu0 0
      %695 = vmatprep.subr.bf16.mxu0 0
      %696 = vmatpush1.bf16.msra.mxu0 0
      %697 = vmatprep.subr.bf16.mxu0 0
      %698 = vmatpush1.bf16.msra.mxu0 0
      %699 = vmatprep.subr.bf16.mxu0 0
      %700 = vmatpush1.bf16.msra.mxu0 0
      %701 = vmatprep.subr.bf16.mxu0 0
      %702 = vmatpush1.bf16.msra.mxu0 0
      %703 = vmatprep.subr.bf16.mxu0 0
      %704 = vmatpush1.bf16.msra.mxu0 0
      %705 = vmatprep.subr.bf16.mxu0 0
      %706 = vmatpush1.bf16.msra.mxu0 0
      %707 = vmatprep.mubr.bf16.mxu0 0
      %708 = vmatmul.mubr.bf16.gmra.mrb[0].mxu0 %v588
      %v709 = vpop.f32.mrb[0].mxu0
      %v710 = vadd.f32 %v625, %v709
      %v711 = vpop.f32.mrb[0].mxu0
      %v712 = vpop.f32.mrb[0].mxu0
      %v713 = vadd.f32 %v625, %v712
      %v714 = vpop.f32.mrb[0].mxu0
      %715 = vmatprep.mubr.bf16.mxu0 0
      %716 = vmatmul.mubr.bf16.gmra.mrb[0].mxu0 %v589
      %v717 = vpop.f32.mrb[0].mxu0
      %v718 = vadd.f32 %v625, %v717
      %v719 = vpop.f32.mrb[0].mxu0
      %v720 = vpop.f32.mrb[0].mxu0
      %v721 = vadd.f32 %v625, %v720
      %v722 = vpop.f32.mrb[0].mxu0
      %723 = vmatprep.mubr.bf16.mxu0 0
      %724 = vmatmul.mubr.bf16.gmra.mrb[0].mxu0 %v590
      %v725 = vpop.f32.mrb[0].mxu0
      %v726 = vadd.f32 %v625, %v725
      %v727 = vpop.f32.mrb[0].mxu0
      %v728 = vpop.f32.mrb[0].mxu0
      %v729 = vadd.f32 %v625, %v728
      %v730 = vpop.f32.mrb[0].mxu0
      %731 = vmatprep.mubr.bf16.mxu0 0
      %732 = vmatmul.mubr.bf16.gmra.mrb[0].mxu0 %v591
      %v733 = vpop.f32.mrb[0].mxu0
      %v734 = vadd.f32 %v625, %v733
      %v735 = vpop.f32.mrb[0].mxu0
      %v736 = vpop.f32.mrb[0].mxu0
      %v737 = vadd.f32 %v625, %v736
      %v738 = vpop.f32.mrb[0].mxu0
      %739 = vmatprep.mubr.bf16.mxu0 0
      %740 = vmatmul.mubr.bf16.gmra.mrb[0].mxu0 %v592
      %v741 = vpop.f32.mrb[0].mxu0
      %v742 = vadd.f32 %v625, %v741
      %v743 = vpop.f32.mrb[0].mxu0
      %v744 = vpop.f32.mrb[0].mxu0
      %v745 = vadd.f32 %v625, %v744
      %v746 = vpop.f32.mrb[0].mxu0
      %747 = vmatprep.mubr.bf16.mxu0 0
      %748 = vmatmul.mubr.bf16.gmra.mrb[0].mxu0 %v593
      %v749 = vpop.f32.mrb[0].mxu0
      %v750 = vadd.f32 %v625, %v749
      %v751 = vpop.f32.mrb[0].mxu0
      %v752 = vpop.f32.mrb[0].mxu0
      %v753 = vadd.f32 %v625, %v752
      %v754 = vpop.f32.mrb[0].mxu0
      %755 = vmatprep.mubr.bf16.mxu0 0
      %756 = vmatmul.mubr.bf16.gmra.mrb[0].mxu0 %v594
      %v757 = vpop.f32.mrb[0].mxu0
      %v758 = vadd.f32 %v625, %v757
      %v759 = vpop.f32.mrb[0].mxu0
      %v760 = vpop.f32.mrb[0].mxu0
      %v761 = vadd.f32 %v625, %v760
      %v762 = vpop.f32.mrb[0].mxu0
      %763 = vmatprep.mubr.bf16.mxu0 0
      %764 = vmatmul.mubr.bf16.gmra.mrb[0].mxu0 %v595
      %v765 = vpop.f32.mrb[0].mxu0
      %v766 = vadd.f32 %v625, %v765
      %v767 = vpop.f32.mrb[0].mxu0
      %v768 = vpop.f32.mrb[0].mxu0
      %v769 = vadd.f32 %v625, %v768
      %v770 = vpop.f32.mrb[0].mxu0
      %771 = vmatprep.mubr.bf16.mxu0 0
      %772 = vmatmul.mubr.bf16.gmra.mrb[0].mxu0 %v596
      %v773 = vpop.f32.mrb[0].mxu0
      %v774 = vadd.f32 %v625, %v773
      %v775 = vpop.f32.mrb[0].mxu0
      %v776 = vpop.f32.mrb[0].mxu0
      %v777 = vadd.f32 %v625, %v776
      %v778 = vpop.f32.mrb[0].mxu0
      %779 = vmatprep.mubr.bf16.mxu0 0
      %780 = vmatmul.mubr.bf16.gmra.mrb[0].mxu0 %v597
      %v781 = vpop.f32.mrb[0].mxu0
      %v782 = vadd.f32 %v625, %v781
      %v783 = vpop.f32.mrb[0].mxu0
      %v784 = vpop.f32.mrb[0].mxu0
      %v785 = vadd.f32 %v625, %v784
      %v786 = vpop.f32.mrb[0].mxu0
      %787 = vmatprep.mubr.bf16.mxu0 0
      %788 = vmatmul.mubr.bf16.gmra.mrb[0].mxu0 %v598
      %v789 = vpop.f32.mrb[0].mxu0
      %v790 = vadd.f32 %v625, %v789
      %v791 = vpop.f32.mrb[0].mxu0
      %v792 = vpop.f32.mrb[0].mxu0
      %v793 = vadd.f32 %v625, %v792
      %v794 = vpop.f32.mrb[0].mxu0
      %795 = vmatprep.mubr.bf16.mxu0 0
      %796 = vmatmul.mubr.bf16.gmra.mrb[0].mxu0 %v599
      %v797 = vpop.f32.mrb[0].mxu0
      %v798 = vadd.f32 %v625, %v797
      %v799 = vpop.f32.mrb[0].mxu0
      %v800 = vpop.f32.mrb[0].mxu0
      %v801 = vadd.f32 %v625, %v800
      %v802 = vpop.f32.mrb[0].mxu0
      %803 = vmatprep.mubr.bf16.mxu0 0
      %804 = vmatmul.mubr.bf16.gmra.mrb[0].mxu0 %v600
      %v805 = vpop.f32.mrb[0].mxu0
      %v806 = vadd.f32 %v625, %v805
      %v807 = vpop.f32.mrb[0].mxu0
      %v808 = vpop.f32.mrb[0].mxu0
      %v809 = vadd.f32 %v625, %v808
      %v810 = vpop.f32.mrb[0].mxu0
      %811 = vmatprep.mubr.bf16.mxu0 0
      %812 = vmatmul.mubr.bf16.gmra.mrb[0].mxu0 %v601
      %v813 = vpop.f32.mrb[0].mxu0
      %v814 = vadd.f32 %v625, %v813
      %v815 = vpop.f32.mrb[0].mxu0
      %v816 = vpop.f32.mrb[0].mxu0
      %v817 = vadd.f32 %v625, %v816
      %v818 = vpop.f32.mrb[0].mxu0
      %819 = vmatprep.mubr.bf16.mxu0 0
      %820 = vmatmul.mubr.bf16.gmra.mrb[0].mxu0 %v602
      %v821 = vpop.f32.mrb[0].mxu0
      %v822 = vadd.f32 %v625, %v821
      %v823 = vpop.f32.mrb[0].mxu0
      %v824 = vpop.f32.mrb[0].mxu0
      %v825 = vadd.f32 %v625, %v824
      %v826 = vpop.f32.mrb[0].mxu0
      %827 = vmatprep.mubr.bf16.mxu0 0
      %828 = vmatmul.mubr.bf16.gmra.mrb[0].mxu0 %v603
      %v829 = vpop.f32.mrb[0].mxu0
      %v830 = vadd.f32 %v625, %v829
      %v831 = vpop.f32.mrb[0].mxu0
      %v832 = vpop.f32.mrb[0].mxu0
      %v833 = vadd.f32 %v625, %v832
      %v834 = vpop.f32.mrb[0].mxu0
      %835 = vdwg.mxu0
      %v836 = vld [vmem:[%s268] sm:$0xff]
      %v837 = vld [vmem:[%s268 + $0x8] sm:$0xff]
      %v838 = vld [vmem:[%s268 + $0x10] sm:$0xff]
      %v839 = vld [vmem:[%s268 + $0x18] sm:$0xff]
      %v840 = vld [vmem:[%s268 + $0x20] sm:$0xff]
      %v841 = vld [vmem:[%s268 + $0x28] sm:$0xff]
      %v842 = vld [vmem:[%s268 + $0x30] sm:$0xff]
      %v843 = vld [vmem:[%s268 + $0x38] sm:$0xff]
      %v844 = vld [vmem:[%s268 + $0x40] sm:$0xff]
      %v845 = vld [vmem:[%s268 + $0x48] sm:$0xff]
      %v846 = vld [vmem:[%s268 + $0x50] sm:$0xff]
      %v847 = vld [vmem:[%s268 + $0x58] sm:$0xff]
      %v848 = vld [vmem:[%s268 + $0x60] sm:$0xff]
      %v849 = vld [vmem:[%s268 + $0x68] sm:$0xff]
      %v850 = vld [vmem:[%s268 + $0x70] sm:$0xff]
      %v851 = vld [vmem:[%s268 + $0x78] sm:$0xff]
      %v852 = vld [vmem:[%s268 + $0x80] sm:$0xff]
      %v853 = vld [vmem:[%s268 + $0x88] sm:$0xff]
      %v854 = vld [vmem:[%s268 + $0x90] sm:$0xff]
      %v855 = vld [vmem:[%s268 + $0x98] sm:$0xff]
      %v856 = vld [vmem:[%s268 + $0xa0] sm:$0xff]
      %v857 = vld [vmem:[%s268 + $0xa8] sm:$0xff]
      %v858 = vld [vmem:[%s268 + $0xb0] sm:$0xff]
      %v859 = vld [vmem:[%s268 + $0xb8] sm:$0xff]
      %v860 = vld [vmem:[%s268 + $0xc0] sm:$0xff]
      %v861 = vld [vmem:[%s268 + $0xc8] sm:$0xff]
      %v862 = vld [vmem:[%s268 + $0xd0] sm:$0xff]
      %v863 = vld [vmem:[%s268 + $0xd8] sm:$0xff]
      %v864 = vld [vmem:[%s268 + $0xe0] sm:$0xff]
      %v865 = vld [vmem:[%s268 + $0xe8] sm:$0xff]
      %v866 = vld [vmem:[%s268 + $0xf0] sm:$0xff]
      %v867 = vld [vmem:[%s268 + $0xf8] sm:$0xff]
      %v868 = vsub.f32 %v710, %v836
      %v869 = vsub.f32 %v713, %v837
      %v870 = vsub.f32 %v718, %v838
      %v871 = vsub.f32 %v721, %v839
      %v872 = vsub.f32 %v726, %v840
      %v873 = vsub.f32 %v729, %v841
      %v874 = vsub.f32 %v734, %v842
      %v875 = vsub.f32 %v737, %v843
      %v876 = vsub.f32 %v742, %v844
      %v877 = vsub.f32 %v745, %v845
      %v878 = vsub.f32 %v750, %v846
      %v879 = vsub.f32 %v753, %v847
      %v880 = vsub.f32 %v758, %v848
      %v881 = vsub.f32 %v761, %v849
      %v882 = vsub.f32 %v766, %v850
      %v883 = vsub.f32 %v769, %v851
      %v884 = vsub.f32 %v774, %v852
      %v885 = vsub.f32 %v777, %v853
      %v886 = vsub.f32 %v782, %v854
      %v887 = vsub.f32 %v785, %v855
      %v888 = vsub.f32 %v790, %v856
      %v889 = vsub.f32 %v793, %v857
      %v890 = vsub.f32 %v798, %v858
      %v891 = vsub.f32 %v801, %v859
      %v892 = vsub.f32 %v806, %v860
      %v893 = vsub.f32 %v809, %v861
      %v894 = vsub.f32 %v814, %v862
      %v895 = vsub.f32 %v817, %v863
      %v896 = vsub.f32 %v822, %v864
      %v897 = vsub.f32 %v825, %v865
      %v898 = vsub.f32 %v830, %v866
      %v899 = vsub.f32 %v833, %v867
      %v900 = vmul.f32 %v868, %v868
      %v901 = vmul.f32 %v869, %v869
      %v902 = vmul.f32 %v870, %v870
      %v903 = vmul.f32 %v871, %v871
      %v904 = vmul.f32 %v872, %v872
      %v905 = vmul.f32 %v873, %v873
      %v906 = vmul.f32 %v874, %v874
      %v907 = vmul.f32 %v875, %v875
      %v908 = vmul.f32 %v876, %v876
      %v909 = vmul.f32 %v877, %v877
      %v910 = vmul.f32 %v878, %v878
      %v911 = vmul.f32 %v879, %v879
      %v912 = vmul.f32 %v880, %v880
      %v913 = vmul.f32 %v881, %v881
      %v914 = vmul.f32 %v882, %v882
      %v915 = vmul.f32 %v883, %v883
      %v916 = vmul.f32 %v884, %v884
      %v917 = vmul.f32 %v885, %v885
      %v918 = vmul.f32 %v886, %v886
      %v919 = vmul.f32 %v887, %v887
      %v920 = vmul.f32 %v888, %v888
      %v921 = vmul.f32 %v889, %v889
      %v922 = vmul.f32 %v890, %v890
      %v923 = vmul.f32 %v891, %v891
      %v924 = vmul.f32 %v892, %v892
      %v925 = vmul.f32 %v893, %v893
      %v926 = vmul.f32 %v894, %v894
      %v927 = vmul.f32 %v895, %v895
      %v928 = vmul.f32 %v896, %v896
      %v929 = vmul.f32 %v897, %v897
      %v930 = vmul.f32 %v898, %v898
      %v931 = vmul.f32 %v899, %v899
      %vm932 = vcmask 130048
      %v933 = vsel %vm932, %v900, 0.0
      %v934 = vsel %vm932, %v901, 0.0
      %v935 = vadd.f32 %v933, %v934
      %v936 = vsel %vm932, %v902, 0.0
      %v937 = vadd.f32 %v935, %v936
      %v938 = vsel %vm932, %v903, 0.0
      %v939 = vadd.f32 %v937, %v938
      %v940 = vsel %vm932, %v904, 0.0
      %v941 = vadd.f32 %v939, %v940
      %v942 = vsel %vm932, %v905, 0.0
      %v943 = vadd.f32 %v941, %v942
      %v944 = vsel %vm932, %v906, 0.0
      %v945 = vadd.f32 %v943, %v944
      %v946 = vsel %vm932, %v907, 0.0
      %v947 = vadd.f32 %v945, %v946
      %v948 = vsel %vm932, %v908, 0.0
      %v949 = vadd.f32 %v947, %v948
      %v950 = vsel %vm932, %v909, 0.0
      %v951 = vadd.f32 %v949, %v950
      %v952 = vsel %vm932, %v910, 0.0
      %v953 = vadd.f32 %v951, %v952
      %v954 = vsel %vm932, %v911, 0.0
      %v955 = vadd.f32 %v953, %v954
      %v956 = vsel %vm932, %v912, 0.0
      %v957 = vadd.f32 %v955, %v956
      %v958 = vsel %vm932, %v913, 0.0
      %v959 = vadd.f32 %v957, %v958
      %v960 = vsel %vm932, %v914, 0.0
      %v961 = vadd.f32 %v959, %v960
      %v962 = vsel %vm932, %v915, 0.0
      %v963 = vadd.f32 %v961, %v962
      %v964 = vsel %vm932, %v916, 0.0
      %v965 = vadd.f32 %v963, %v964
      %v966 = vsel %vm932, %v917, 0.0
      %v967 = vadd.f32 %v965, %v966
      %v968 = vsel %vm932, %v918, 0.0
      %v969 = vadd.f32 %v967, %v968
      %v970 = vsel %vm932, %v919, 0.0
      %v971 = vadd.f32 %v969, %v970
      %v972 = vsel %vm932, %v920, 0.0
      %v973 = vadd.f32 %v971, %v972
      %v974 = vsel %vm932, %v921, 0.0
      %v975 = vadd.f32 %v973, %v974
      %v976 = vsel %vm932, %v922, 0.0
      %v977 = vadd.f32 %v975, %v976
      %v978 = vsel %vm932, %v923, 0.0
      %v979 = vadd.f32 %v977, %v978
      %v980 = vsel %vm932, %v924, 0.0
      %v981 = vadd.f32 %v979, %v980
      %v982 = vsel %vm932, %v925, 0.0
      %v983 = vadd.f32 %v981, %v982
      %v984 = vsel %vm932, %v926, 0.0
      %v985 = vadd.f32 %v983, %v984
      %v986 = vsel %vm932, %v927, 0.0
      %v987 = vadd.f32 %v985, %v986
      %v988 = vsel %vm932, %v928, 0.0
      %v989 = vadd.f32 %v987, %v988
      %v990 = vsel %vm932, %v929, 0.0
      %v991 = vadd.f32 %v989, %v990
      %v992 = vsel %vm932, %v930, 0.0
      %v993 = vadd.f32 %v991, %v992
      %v994 = vsel %vm932, %v931, 0.0
      %v995 = vadd.f32 %v993, %v994
      %996 = vadd.xlane.f32.xlu0 %v995
      %v997 = vpop.xlane.xlu0 %996
      %v998 = vrot.slane %v997, 4
      %v999 = vadd.f32 %v997, %v998
      %v1000 = vrot.slane %v999, 2
      %v1001 = vadd.f32 %v999, %v1000
      %v1002 = vrot.slane %v1001, 1
      %v1003 = vadd.f32 %v1001, %v1002
      %s1004 = vtos %v1003
      %v1005 = vlaneseq
      %v1006 = vshrl.u32 %v1005, 7
      %v1007 = vlaneseq
      %v1008 = vand.u32 %v1007, 127
      %vm1009 = vcmp.eq.s32.totalorder %v1006, 0
      %vm1010 = vcmp.eq.s32.totalorder %v1008, 0
      %vm1011 = vmand %vm1009, %vm1010
      %v1012 = vstv %s1004
      %v1013 = vsel %vm1011, %v1012, 0.0
      %1014 = vst [vmem:[%s273] sm:$0xff] %v1013
      %p1015 = scmp.lt.s32.totalorder %s17, 1
      %s1016 = scalar_select %p1015, %s17, 1
      %s1017 = smul.addr %s1016, 8
      %s1018 = scalar_lea.vmem %s6, %s1017
      // Predicated region
      $region45: #{example_train_network_forward.1} parent=43 // pred_check
        %p1019 = pneg %p171
      $region46: #{example_train_network_forward.1} parent=43 // pred_check_branch
        %1021 = sbr.rel (%p1019) target = $region48
      $region47: #{example_train_network_forward.1} parent=43 // pred_region
        _
      $region48: #{example_train_network_forward.1} parent=43 // pred_fallthru
        _
    $region44: #{example_train_network_forward.1} parent=5 // pred_fallthru
      _
    %p1022 = scmp.le.s32.totalorder 2, %s12
    // Predicated region
    $region49: #{example_train_network_forward.1} parent=5 // pred_check
      %p1023 = pneg %p1022
    $region50: #{example_train_network_forward.1} parent=5 // pred_check_branch
      %1025 = sbr.rel (%p1023) target = $region52
    $region51: #{example_train_network_forward.1} parent=5 // pred_region
      %s1026 = ssub.s32 %s12, 2
      // Predicated region
      $region53: #{example_train_network_forward.1} parent=51 // pred_check
        %p1027 = pneg %p177
      $region54: #{example_train_network_forward.1} parent=51 // pred_check_branch
        %1029 = sbr.rel (%p1027) target = $region56
      $region55: #{example_train_network_forward.1} parent=51 // pred_region
        %p1030 = scmp.lt.s32.totalorder %s18, 1
        %s1031 = scalar_select %p1030, %s18, 1
        %s1032 = smul.addr %s1031, 8
        %s1033 = scalar_lea.vmem %s6, %s1032
      $region56: #{example_train_network_forward.1} parent=51 // pred_fallthru
        _
    $region52: #{example_train_network_forward.1} parent=5 // pred_fallthru
      _
  $region6: #{example_train_network_forward.1} parent=0 // loop_footer
    %s16 = sadd.s32 1, %s12
  $region7: #{example_train_network_forward.1} parent=0 // loop_footer_branch
    %11 = sbr.rel target = $region3
  $region8: #{example_train_network_forward.1} parent=0 // loop_exit
    _

</llo_original>
